<compile_context>
chip_gen: v5e
topology: v5e:2x2
jax: 0.10.0
libtpu: 0.0.40
codegen_flags: <defaults>
</compile_context>

<pallas_src>
import functools

import jax
import jax.numpy as jnp
from jax.experimental import pallas as pl
from jax.experimental.pallas import tpu as pltpu


def _round_up(n, m):
    return ((n + m - 1) // m) * m


def _fused_mlp_kernel(x_ref, w_ref, b_ref, out_ref, *, ipad, hpad, ncpad):
    """Fused two-branch MLP: 3 block-diagonal matmuls replace 5 Linear layers."""
    x = x_ref[...]  # (TILE_B, ipad) bf16, [x1 | x2 | zero-pad]

    # Static, tile-aligned slices of the packed weight / bias slabs.
    w1 = w_ref[pl.ds(0, ipad), pl.ds(0, hpad)]             # blockdiag(w11, w21)
    w2 = w_ref[pl.ds(ipad, hpad), pl.ds(0, hpad)]          # blockdiag(w12, w22)
    w3 = w_ref[pl.ds(ipad + hpad, hpad), pl.ds(0, ncpad)]  # fc3 weight (padded)

    b1 = b_ref[pl.ds(0, 1), pl.ds(0, hpad)]                # [b11 | b21 | 0]
    b2 = b_ref[pl.ds(1, 1), pl.ds(0, hpad)]                # [b12 | b22 | 0]
    b3 = b_ref[pl.ds(2, 1), pl.ds(0, ncpad)]               # [b3 | 0]

    # Layer 1 (fc11 | fc21) -> relu.  Dropout: eval-mode identity.
    h = jnp.dot(x, w1, preferred_element_type=jnp.float32)
    h = jnp.maximum(h + b1, 0.0)

    # Layer 2 (fc12 | fc22) -> relu.  Dropout: eval-mode identity.
    h = jnp.dot(h.astype(jnp.bfloat16), w2, preferred_element_type=jnp.float32)
    h = jnp.maximum(h + b2, 0.0)

    # fc3 on the (already contiguous) concat of both branch outputs.
    out = jnp.dot(h.astype(jnp.bfloat16), w3, preferred_element_type=jnp.float32)
    out_ref[...] = (out + b3).astype(out_ref.dtype)

    # TODO(synk): training-mode dropout (p=0.5) would need pltpu.prng_seed +
    # pltpu.prng_random_bits Bernoulli masks and 1/(1-p) scaling; eval-mode
    # (identity) semantics are implemented here.


def dnn_net_two_dif_forward(x1, x2, params, *, tile_b=128):
    """Pallas forward. x1: (B, I1), x2: (B, I2). Returns (B, num_classes) f32."""
    (w11, b11, w12, b12, w21, b21, w22, b22, w3, b3) = params
    B, I1 = x1.shape
    I2 = x2.shape[1]
    H1 = w11.shape[1]
    H2 = w21.shape[1]
    NC = w3.shape[1]

    # Lane-dense padded sizes (f32/bf16 vreg lanes = 128).
    ipad = _round_up(I1 + I2, 128)
    hpad = _round_up(H1 + H2, 128)
    ncpad = _round_up(NC, 128)
    lpad = max(hpad, ncpad)

    tile_b = min(tile_b, _round_up(B, 8))
    bp = _round_up(B, tile_b)

    f32 = jnp.float32

    # ---- pack inputs: [x1 | x2], zero-padded to (bp, ipad), bf16 -----------
    x = jnp.zeros((bp, ipad), f32)
    x = x.at[:B, :I1].set(x1).at[:B, I1:I1 + I2].set(x2)
    x = x.astype(jnp.bfloat16)

    # ---- pack weights into ONE block-diagonal bf16 slab ---------------------
    w1p = jnp.zeros((ipad, lpad), f32)
    w1p = w1p.at[:I1, :H1].set(w11).at[I1:I1 + I2, H1:H1 + H2].set(w21)
    w2p = jnp.zeros((hpad, lpad), f32)
    w2p = w2p.at[:H1, :H1].set(w12).at[H1:H1 + H2, H1:H1 + H2].set(w22)
    w3p = jnp.zeros((hpad, lpad), f32)
    w3p = w3p.at[:H1 + H2, :NC].set(w3)
    w_slab = jnp.concatenate([w1p, w2p, w3p], axis=0).astype(jnp.bfloat16)

    # ---- pack biases into ONE f32 slab (added post f32 accumulation) --------
    b_slab = jnp.zeros((8, lpad), f32)
    b_slab = (b_slab.at[0, :H1].set(b11.reshape(-1))
                    .at[0, H1:H1 + H2].set(b21.reshape(-1))
                    .at[1, :H1].set(b12.reshape(-1))
                    .at[1, H1:H1 + H2].set(b22.reshape(-1))
                    .at[2, :NC].set(b3.reshape(-1)))

    kernel = functools.partial(_fused_mlp_kernel,
                               ipad=ipad, hpad=hpad, ncpad=ncpad)

    out_pad = pl.pallas_call(
        kernel,
        out_shape=jax.ShapeDtypeStruct((bp, ncpad), jnp.float32),
        grid=(bp // tile_b,),
        in_specs=[
            pl.BlockSpec((tile_b, ipad), lambda i: (i, 0)),     # batch-tiled x
            pl.BlockSpec(w_slab.shape, lambda i: (0, 0)),       # resident weights
            pl.BlockSpec(b_slab.shape, lambda i: (0, 0)),       # resident biases
        ],
        out_specs=pl.BlockSpec((tile_b, ncpad), lambda i: (i, 0)),
        compiler_params=pltpu.CompilerParams(
            dimension_semantics=("parallel",),      # megacore sharding on v7x
            vmem_limit_bytes=32 * 1024 * 1024,      # explicit, portable budget
        ),
    )(x, w_slab, b_slab)

    return out_pad[:B, :NC]


def init_params(key, input_size1, input_size2, hidden_size1, hidden_size2,
                num_classes):
    """Deterministic synthetic parameters (shapes match the PyTorch module)."""
    ks = jax.random.split(key, 5)

    def linear(k, fan_in, fan_out):
        kw, kb = jax.random.split(k)
        bound = 1.0 / jnp.sqrt(fan_in)
        w = jax.random.uniform(kw, (fan_in, fan_out), jnp.float32, -bound, bound)
        b = jax.random.uniform(kb, (1, fan_out), jnp.float32, -bound, bound)
        return w, b

    w11, b11 = linear(ks[0], input_size1, hidden_size1)
    w12, b12 = linear(ks[1], hidden_size1, hidden_size1)
    w21, b21 = linear(ks[2], input_size2, hidden_size2)
    w22, b22 = linear(ks[3], hidden_size2, hidden_size2)
    w3, b3 = linear(ks[4], hidden_size1 + hidden_size2, num_classes)
    return (w11, b11, w12, b12, w21, b21, w22, b22, w3, b3)


def reference_forward(x1, x2, params):
    """Plain-JAX f32 reference of the PyTorch forward (eval mode)."""
    (w11, b11, w12, b12, w21, b21, w22, b22, w3, b3) = params
    o1 = jnp.maximum(x1 @ w11 + b11, 0.0)
    o1 = jnp.maximum(o1 @ w12 + b12, 0.0)
    o2 = jnp.maximum(x2 @ w21 + b21, 0.0)
    o2 = jnp.maximum(o2 @ w22 + b22, 0.0)
    return jnp.concatenate([o1, o2], axis=1) @ w3 + b3


if __name__ == "__main__":
    # Small shapes consistent with the module's forward (different hidden sizes).
    B, I1, I2, H1, H2, NC = 128, 16, 24, 32, 48, 10

    key = jax.random.PRNGKey(0)
    k_x1, k_x2, k_p = jax.random.split(key, 3)
    x1 = jax.random.normal(k_x1, (B, I1), jnp.float32)
    x2 = jax.random.normal(k_x2, (B, I2), jnp.float32)
    params = init_params(k_p, I1, I2, H1, H2, NC)

    out = dnn_net_two_dif_forward(x1, x2, params, tile_b=64)  # grid = (2,)
    out = jax.block_until_ready(out)

    ref = reference_forward(x1, x2, params)
    assert out.shape == (B, NC)
    # bf16 MXU operands (f32 accumulation) -> loosened tolerance vs f32 reference.
    assert jnp.allclose(out, ref, atol=5e-2, rtol=5e-2), "mismatch vs reference"

    print("KERNEL_OK")
</pallas_src>

<mosaic_0001>
module attributes {stable_mosaic.version = 11 : i64} {
  func.func @_fused_mlp_kernel(%arg0: i32, %arg1: memref<64x128xbf16, #tpu.memory_space<vmem>>, %arg2: memref<384x128xbf16, #tpu.memory_space<vmem>>, %arg3: memref<8x128xf32, #tpu.memory_space<vmem>>, %arg4: memref<64x128xf32, #tpu.memory_space<vmem>>) attributes {dimension_semantics = [#tpu.dimension_semantics<parallel>], iteration_bounds = array<i64: 2>, scalar_prefetch = 0 : i64, scratch_operands = 0 : i64, tpu.core_type = #tpu.core_type<tc>, window_params = [{transform_indices = @transform_0, window_bounds = array<i64: 64, 128>}, {pipeline_mode = #tpu.pipeline_mode<synchronous>, transform_indices = @transform_1, window_bounds = array<i64: 384, 128>}, {pipeline_mode = #tpu.pipeline_mode<synchronous>, transform_indices = @transform_2, window_bounds = array<i64: 8, 128>}, {transform_indices = @transform_3, window_bounds = array<i64: 64, 128>}]} {
    %c0 = arith.constant 0 : index
    %c0_0 = arith.constant 0 : index
    %0 = vector.load %arg1[%c0, %c0_0] : memref<64x128xbf16, #tpu.memory_space<vmem>>, vector<64x128xbf16>
    %c0_1 = arith.constant 0 : index
    %c0_2 = arith.constant 0 : index
    %1 = vector.load %arg2[%c0_1, %c0_2] : memref<384x128xbf16, #tpu.memory_space<vmem>>, vector<128x128xbf16>
    %c128 = arith.constant 128 : index
    %c0_3 = arith.constant 0 : index
    %2 = vector.load %arg2[%c128, %c0_3] : memref<384x128xbf16, #tpu.memory_space<vmem>>, vector<128x128xbf16>
    %c256 = arith.constant 256 : index
    %c0_4 = arith.constant 0 : index
    %3 = vector.load %arg2[%c256, %c0_4] : memref<384x128xbf16, #tpu.memory_space<vmem>>, vector<128x128xbf16>
    %c0_5 = arith.constant 0 : index
    %c0_6 = arith.constant 0 : index
    %4 = vector.load %arg3[%c0_5, %c0_6] : memref<8x128xf32, #tpu.memory_space<vmem>>, vector<1x128xf32>
    %c1 = arith.constant 1 : index
    %c0_7 = arith.constant 0 : index
    %5 = vector.load %arg3[%c1, %c0_7] : memref<8x128xf32, #tpu.memory_space<vmem>>, vector<1x128xf32>
    %c2 = arith.constant 2 : index
    %c0_8 = arith.constant 0 : index
    %6 = vector.load %arg3[%c2, %c0_8] : memref<8x128xf32, #tpu.memory_space<vmem>>, vector<1x128xf32>
    %cst = arith.constant dense<0.000000e+00> : vector<64x128xf32>
    %7 = tpu.matmul %0, %1, %cst {dimension_numbers = #tpu.dot_dimension_numbers<[1], [0], [0], [1], [0, 0, 1, 1], [], []>} : vector<64x128xbf16>, vector<128x128xbf16>, vector<64x128xf32> -> vector<64x128xf32>
    %8 = vector.broadcast %4 : vector<1x128xf32> to vector<64x128xf32>
    %9 = arith.addf %7, %8 : vector<64x128xf32>
    %cst_9 = arith.constant 0.000000e+00 : f32
    %10 = vector.broadcast %cst_9 : f32 to vector<64x128xf32>
    %11 = arith.maximumf %9, %10 : vector<64x128xf32>
    %12 = arith.truncf %11 : vector<64x128xf32> to vector<64x128xbf16>
    %cst_10 = arith.constant dense<0.000000e+00> : vector<64x128xf32>
    %13 = tpu.matmul %12, %2, %cst_10 {dimension_numbers = #tpu.dot_dimension_numbers<[1], [0], [0], [1], [0, 0, 1, 1], [], []>} : vector<64x128xbf16>, vector<128x128xbf16>, vector<64x128xf32> -> vector<64x128xf32>
    %14 = vector.broadcast %5 : vector<1x128xf32> to vector<64x128xf32>
    %15 = arith.addf %13, %14 : vector<64x128xf32>
    %cst_11 = arith.constant 0.000000e+00 : f32
    %16 = vector.broadcast %cst_11 : f32 to vector<64x128xf32>
    %17 = arith.maximumf %15, %16 : vector<64x128xf32>
    %18 = arith.truncf %17 : vector<64x128xf32> to vector<64x128xbf16>
    %cst_12 = arith.constant dense<0.000000e+00> : vector<64x128xf32>
    %19 = tpu.matmul %18, %3, %cst_12 {dimension_numbers = #tpu.dot_dimension_numbers<[1], [0], [0], [1], [0, 0, 1, 1], [], []>} : vector<64x128xbf16>, vector<128x128xbf16>, vector<64x128xf32> -> vector<64x128xf32>
    %20 = vector.broadcast %6 : vector<1x128xf32> to vector<64x128xf32>
    %21 = arith.addf %19, %20 : vector<64x128xf32>
    %c0_13 = arith.constant 0 : index
    %c0_14 = arith.constant 0 : index
    %22 = vector.load %arg4[%c0_13, %c0_14] : memref<64x128xf32, #tpu.memory_space<vmem>>, vector<64x128xf32>
    tpu.vector_store %arg4[%c0_13, %c0_14], %21 {strides = array<i32>} : memref<64x128xf32, #tpu.memory_space<vmem>>, vector<64x128xf32>,
    return
  }
  func.func @transform_0(%arg0: i32) -> (i32, i32) {
    %c0_i32 = arith.constant 0 : i32
    %c0_i32_0 = arith.constant 0 : i32
    return %arg0, %c0_i32 : i32, i32
  }
  func.func @transform_1(%arg0: i32) -> (i32, i32) {
    %c0_i32 = arith.constant 0 : i32
    %c0_i32_0 = arith.constant 0 : i32
    %c0_i32_1 = arith.constant 0 : i32
    return %c0_i32, %c0_i32_0 : i32, i32
  }
  func.func @transform_2(%arg0: i32) -> (i32, i32) {
    %c0_i32 = arith.constant 0 : i32
    %c0_i32_0 = arith.constant 0 : i32
    %c0_i32_1 = arith.constant 0 : i32
    return %c0_i32, %c0_i32_0 : i32, i32
  }
  func.func @transform_3(%arg0: i32) -> (i32, i32) {
    %c0_i32 = arith.constant 0 : i32
    %c0_i32_0 = arith.constant 0 : i32
    return %arg0, %c0_i32 : i32, i32
  }
}

</mosaic_0001>

<llo_original>
// kernel: tpu_custom_call.1
$region0: #{tpu_custom_call.1}
  #allocation0 [shape = 'u32[]', space=smem, size = 0x4, offset = 0x4, fixed_abs, tag = 'smem constant byte address 0x4 - core index']
  #allocation1 [shape = 'u32[72,128]{1,0:T(1,128)}', space=vmem, size = 0x9000, scoped, tag = 'internal scratch']
  %s0 = inlined_call_operand.hbm [shape: bf16[128,128], index: 0, kind: input, shape index: {}]
  %s1 = inlined_call_operand.hbm [shape: bf16[384,128], index: 1, kind: input, shape index: {}]
  %s2 = inlined_call_operand.hbm [shape: f32[8,128], index: 2, kind: input, shape index: {}]
  %s3 = inlined_call_operand.hbm [shape: f32[128,128], index: 3, kind: output, shape index: {}]
  %s4 = sld [smem:[#allocation0]]
  $region57: #{tpu_custom_call.1} parent=0
    _
  %s6 = ssub.s32 1, %s4
  %s7 = scalar_select 0, %s6, %s4
  $region1: #{tpu_custom_call.1} parent=0
    #allocation2 [shape = 'u8[32768]{0}', space=vmem, size = 0x8000, scoped, tag = 'input window, operand 0']
    #allocation3 [shape = 's32[2]{0}', space=sflag, size = 0x8, scoped, tag = 'scoped memory for tpu_custom_call.1']
    #allocation4 [shape = 's32[2]{0}', space=sflag, size = 0x8, scoped, tag = 'scoped memory for tpu_custom_call.1']
    #allocation5 [shape = 'u8[98304]{0}', space=vmem, size = 0x18000, scoped, tag = 'input window, operand 1, single buffered']
    #allocation6 [shape = 's32[1]{0}', space=sflag, size = 0x4, scoped, tag = 'scoped memory for tpu_custom_call.1']
    #allocation7 [shape = 'u8[4096]{0}', space=vmem, size = 0x1000, scoped, tag = 'input window, operand 2, single buffered']
    #allocation8 [shape = 'u8[65536]{0}', space=vmem, size = 0x10000, scoped, tag = 'output window, operand 0']
    %8 = vsyncpa [#allocation3], 0
    %s9 = scalar_lea.sflag [#allocation3], 1
    %10 = vsyncpa %s9, 0
    %11 = vsyncpa [#allocation6], 0
    %12 = vsyncpa [#allocation4], 0
    %s13 = scalar_lea.sflag [#allocation4], 1
    %14 = vsyncpa %s13, 0
    loop: start=0, step=1, limit=4
    $region2: #{tpu_custom_call.1} parent=1 // loop_pre_header
      _
    $region3: #{tpu_custom_call.1} parent=1 // loop_header
      %s16 = sphi 0, %s20
      %p17 = scmp.ge.s32.totalorder %s16, 4
      %s26 = sphi 0, %s28
      %s29 = sphi 0, %s26
      %s30 = sphi 0, %s29
      %s46 = sphi 0, %s30
      %s50 = sphi 0, %s50
      %s52 = sphi 0, %s50
      %s53 = sphi 0, %s52
      %s67 = sphi 0, %s53
      %s71 = sphi 0, %s71
      %s73 = sphi 0, %s71
      %s74 = sphi 0, %s73
      %s88 = sphi 0, %s74
      %s94 = sphi 0, %s96
      %s97 = sphi 0, %s94
      %s98 = sphi 0, %s97
      %s114 = sphi 0, %s98
    $region4: #{tpu_custom_call.1} parent=1 // loop_header_branch
      %19 = sbr.rel (%p17) target = $region8
    $region5: #{tpu_custom_call.1} parent=1 // loop_body
      %s21 = ssub.s32 %s16, 1
      %s22 = ssub.s32 %s16, 2
      %s23 = sadd.s32 %s16, 1
      %s24 = ssub.s32 %s16, %s23
      %p25 = scmp.eq.s32.totalorder %s24, 0
      %s27 = sadd.s32 %s26, 1
      %s28 = scalar_select %p25, %s26, %s27
      %p31 = pneg %p25
      %p32 = scmp.eq.s32.totalorder %s16, 1
      %p33 = por %p31, %p32
      %p34 = scmp.ne.s32.totalorder %s26, %s29
      %p35 = scmp.eq.s32.totalorder %s16, 0
      %p36 = por %p34, %p35
      %p37 = scmp.ne.s32.totalorder %s26, %s29
      %p38 = scmp.eq.s32.totalorder %s21, 1
      %p39 = por %p37, %p38
      %p40 = scmp.ne.s32.totalorder %s29, %s30
      %p41 = scmp.eq.s32.totalorder %s21, 0
      %p42 = por %p40, %p41
      %p43 = scmp.ne.s32.totalorder %s29, %s30
      %p44 = scmp.eq.s32.totalorder %s22, 1
      %p45 = por %p43, %p44
      %p47 = scmp.ne.s32.totalorder %s30, %s46
      %p48 = scmp.eq.s32.totalorder %s22, 0
      %p49 = por %p47, %p48
      %s51 = sadd.s32 %s50, 1
      %p54 = scmp.eq.s32.totalorder %s16, 1
      %p55 = scmp.ne.s32.totalorder %s50, %s52
      %p56 = scmp.eq.s32.totalorder %s16, 0
      %p57 = por %p55, %p56
      %p58 = scmp.ne.s32.totalorder %s50, %s52
      %p59 = scmp.eq.s32.totalorder %s21, 1
      %p60 = por %p58, %p59
      %p61 = scmp.ne.s32.totalorder %s52, %s53
      %p62 = scmp.eq.s32.totalorder %s21, 0
      %p63 = por %p61, %p62
      %p64 = scmp.ne.s32.totalorder %s52, %s53
      %p65 = scmp.eq.s32.totalorder %s22, 1
      %p66 = por %p64, %p65
      %p68 = scmp.ne.s32.totalorder %s53, %s67
      %p69 = scmp.eq.s32.totalorder %s22, 0
      %p70 = por %p68, %p69
      %s72 = sadd.s32 %s71, 1
      %p75 = scmp.eq.s32.totalorder %s16, 1
      %p76 = scmp.ne.s32.totalorder %s71, %s73
      %p77 = scmp.eq.s32.totalorder %s16, 0
      %p78 = por %p76, %p77
      %p79 = scmp.ne.s32.totalorder %s71, %s73
      %p80 = scmp.eq.s32.totalorder %s21, 1
      %p81 = por %p79, %p80
      %p82 = scmp.ne.s32.totalorder %s73, %s74
      %p83 = scmp.eq.s32.totalorder %s21, 0
      %p84 = por %p82, %p83
      %p85 = scmp.ne.s32.totalorder %s73, %s74
      %p86 = scmp.eq.s32.totalorder %s22, 1
      %p87 = por %p85, %p86
      %p89 = scmp.ne.s32.totalorder %s74, %s88
      %p90 = scmp.eq.s32.totalorder %s22, 0
      %p91 = por %p89, %p90
      %s92 = ssub.s32 %s16, %s23
      %p93 = scmp.eq.s32.totalorder %s92, 0
      %s95 = sadd.s32 %s94, 1
      %s96 = scalar_select %p93, %s94, %s95
      %p99 = pneg %p93
      %p100 = scmp.eq.s32.totalorder %s16, 1
      %p101 = por %p99, %p100
      %p102 = scmp.ne.s32.totalorder %s94, %s97
      %p103 = scmp.eq.s32.totalorder %s16, 0
      %p104 = por %p102, %p103
      %p105 = scmp.ne.s32.totalorder %s94, %s97
      %p106 = scmp.eq.s32.totalorder %s21, 1
      %p107 = por %p105, %p106
      %p108 = scmp.ne.s32.totalorder %s97, %s98
      %p109 = scmp.eq.s32.totalorder %s21, 0
      %p110 = por %p108, %p109
      %p111 = scmp.ne.s32.totalorder %s97, %s98
      %p112 = scmp.eq.s32.totalorder %s22, 1
      %p113 = por %p111, %p112
      %p115 = scmp.ne.s32.totalorder %s98, %s114
      %p116 = scmp.eq.s32.totalorder %s22, 0
      %p117 = por %p115, %p116
      %p118 = scmp.le.s32.totalorder 1, %s16
      %p119 = scmp.lt.s32.totalorder %s16, 3
      %p120 = pnand %p118, %p119
      %p121 = pneg %p120
      // Predicated region
      $region9: #{tpu_custom_call.1} parent=5 // pred_check
        _
      $region10: #{tpu_custom_call.1} parent=5 // pred_check_branch
        %123 = sbr.rel (%p120) target = $region12
      $region11: #{tpu_custom_call.1} parent=5 // pred_region
        %s124 = ssub.s32 %s16, 1
        // Predicated region
        $region13: #{tpu_custom_call.1} parent=11 // pred_check
          %p125 = pneg %p63
        $region14: #{tpu_custom_call.1} parent=11 // pred_check_branch
          %127 = sbr.rel (%p125) target = $region16
        $region15: #{tpu_custom_call.1} parent=11 // pred_region
          %129 = vsyncadd [#allocation6], 0
          %s130 = sshll.u32 %s1, 4
          %s131 = int_to_ptr.hbm [resolvable:$true] %s130
          %s132 = sshll.u32 [#allocation5], 4
          %s133 = int_to_ptr.vmem [resolvable:$true] %s132
          %138 = dma.hbm_to_vmem [thread:$0]  %s131, 3072, %s133, [#allocation6], 64, 64, 4
        $region16: #{tpu_custom_call.1} parent=11 // pred_fallthru
          _
        // Predicated region
        $region17: #{tpu_custom_call.1} parent=11 // pred_check
          %p139 = pneg %p84
        $region18: #{tpu_custom_call.1} parent=11 // pred_check_branch
          %141 = sbr.rel (%p139) target = $region20
        $region19: #{tpu_custom_call.1} parent=11 // pred_region
          %143 = vsyncadd [#allocation6], 0
          %s145 = sshll.u32 %s2, 4
          %s146 = int_to_ptr.hbm [resolvable:$true] %s145
          %s147 = sshll.u32 [#allocation7], 4
          %s148 = int_to_ptr.vmem [resolvable:$true] %s147
          %150 = dma.hbm_to_vmem [thread:$0]  %s146, 128, %s148, [#allocation6]
        $region20: #{tpu_custom_call.1} parent=11 // pred_fallthru
          _
      $region12: #{tpu_custom_call.1} parent=5 // pred_fallthru
        _
      %p151 = scmp.lt.s32.totalorder %s16, 2
      // Predicated region
      $region21: #{tpu_custom_call.1} parent=5 // pred_check
        %p152 = pneg %p151
      $region22: #{tpu_custom_call.1} parent=5 // pred_check_branch
        %154 = sbr.rel (%p152) target = $region24
      $region23: #{tpu_custom_call.1} parent=5 // pred_region
        // Predicated region
        $region25: #{tpu_custom_call.1} parent=23 // pred_check
          %p155 = pneg %p36
        $region26: #{tpu_custom_call.1} parent=23 // pred_check_branch
          %157 = sbr.rel (%p155) target = $region28
        $region27: #{tpu_custom_call.1} parent=23 // pred_region
          %s158 = sand.u32 %s26, 1
          %s159 = scalar_lea.sflag [#allocation3], %s158
          %s160 = sand.u32 %s26, 1
          %s161 = smul.addr %s160, 32
          %s162 = scalar_lea.vmem [#allocation2], %s161
          %s163 = smul.u32 8, %s16
          %165 = vsyncadd %s159, 0
          %s166 = smul.addr %s163, 4
          %s167 = scalar_lea.hbm %s0, %s166
          %s168 = sshll.u32 %s167, 4
          %s169 = int_to_ptr.hbm [resolvable:$true] %s168
          %s170 = sshll.u32 %s162, 4
          %s171 = int_to_ptr.vmem [resolvable:$true] %s170
          %176 = dma.hbm_to_vmem [thread:$0]  %s169, 512, %s171, %s159, 64, 64, 4
        $region28: #{tpu_custom_call.1} parent=23 // pred_fallthru
          _
      $region24: #{tpu_custom_call.1} parent=5 // pred_fallthru
        _
      %p177 = scmp.le.s32.totalorder 1, %s16
      %p178 = scmp.lt.s32.totalorder %s16, 3
      %p179 = pnand %p177, %p178
      %p180 = pneg %p179
      // Predicated region
      $region29: #{tpu_custom_call.1} parent=5 // pred_check
        _
      $region30: #{tpu_custom_call.1} parent=5 // pred_check_branch
        %182 = sbr.rel (%p179) target = $region32
      $region31: #{tpu_custom_call.1} parent=5 // pred_region
        %s183 = ssub.s32 %s16, 1
        %s184 = sand.u32 %s29, 1
        %s185 = scalar_lea.sflag [#allocation3], %s184
        %s186 = sand.u32 %s29, 1
        %s187 = smul.addr %s186, 32
        %s188 = scalar_lea.vmem [#allocation2], %s187
        // Predicated region
        $region33: #{tpu_custom_call.1} parent=31 // pred_check
          %p189 = pneg %p42
        $region34: #{tpu_custom_call.1} parent=31 // pred_check_branch
          %191 = sbr.rel (%p189) target = $region36
        $region35: #{tpu_custom_call.1} parent=31 // pred_region
          %193 = dma.done %s185, 512
        $region36: #{tpu_custom_call.1} parent=31 // pred_fallthru
          _
        // Predicated region
        $region37: #{tpu_custom_call.1} parent=31 // pred_check
          %p194 = pneg %p63
        $region38: #{tpu_custom_call.1} parent=31 // pred_check_branch
          %196 = sbr.rel (%p194) target = $region40
        $region39: #{tpu_custom_call.1} parent=31 // pred_region
          %198 = dma.done [#allocation6], 3072
        $region40: #{tpu_custom_call.1} parent=31 // pred_fallthru
          _
        // Predicated region
        $region41: #{tpu_custom_call.1} parent=31 // pred_check
          %p199 = pneg %p84
        $region42: #{tpu_custom_call.1} parent=31 // pred_check_branch
          %201 = sbr.rel (%p199) target = $region44
        $region43: #{tpu_custom_call.1} parent=31 // pred_region
          %203 = dma.done [#allocation6], 128
        $region44: #{tpu_custom_call.1} parent=31 // pred_fallthru
          _
        %s204 = sand.u32 %s29, 1
        %s205 = scalar_lea.sflag [#allocation3], %s204
        %s206 = sand.u32 %s29, 1
        %s207 = smul.addr %s206, 32
        %s208 = scalar_lea.vmem [#allocation2], %s207
        %p209 = pneg %p42
        %p210 = pneg %p39
        %p211 = pneg %p63
        %p212 = pneg %p60
        %p213 = pneg %p84
        %p214 = pneg %p81
        %p215 = pneg %p110
        %p216 = pneg %p107
        %s217 = sand.u32 %s97, 1
        %s218 = scalar_lea.sflag [#allocation4], %s217
        %s219 = sand.u32 %s97, 1
        %s220 = smul.addr %s219, 64
        %s221 = scalar_lea.vmem [#allocation8], %s220
        %s222 = smul.u32 8, %s21
        %s223 = smul.u32 8, %s21
        %v224 = vld [vmem:[%s188] sm:$0xf]
        %v225 = vld [vmem:[%s188 + $0x4] sm:$0xf]
        %v226 = vld [vmem:[%s188 + $0x8] sm:$0xf]
        %v227 = vld [vmem:[%s188 + $0xc] sm:$0xf]
        %v228 = vld [vmem:[%s188 + $0x10] sm:$0xf]
        %v229 = vld [vmem:[%s188 + $0x14] sm:$0xf]
        %v230 = vld [vmem:[%s188 + $0x18] sm:$0xf]
        %v231 = vld [vmem:[%s188 + $0x1c] sm:$0xf]
        %v232 = vld [vmem:[#allocation5] sm:$0xf]
        %v233 = vld [vmem:[#allocation5 + $0x4] sm:$0xf]
        %v234 = vld [vmem:[#allocation5 + $0x8] sm:$0xf]
        %v235 = vld [vmem:[#allocation5 + $0xc] sm:$0xf]
        %v236 = vld [vmem:[#allocation5 + $0x10] sm:$0xf]
        %v237 = vld [vmem:[#allocation5 + $0x14] sm:$0xf]
        %v238 = vld [vmem:[#allocation5 + $0x18] sm:$0xf]
        %v239 = vld [vmem:[#allocation5 + $0x1c] sm:$0xf]
        %v240 = vld [vmem:[#allocation5 + $0x20] sm:$0xf]
        %v241 = vld [vmem:[#allocation5 + $0x24] sm:$0xf]
        %v242 = vld [vmem:[#allocation5 + $0x28] sm:$0xf]
        %v243 = vld [vmem:[#allocation5 + $0x2c] sm:$0xf]
        %v244 = vld [vmem:[#allocation5 + $0x30] sm:$0xf]
        %v245 = vld [vmem:[#allocation5 + $0x34] sm:$0xf]
        %v246 = vld [vmem:[#allocation5 + $0x38] sm:$0xf]
        %v247 = vld [vmem:[#allocation5 + $0x3c] sm:$0xf]
        %v248 = vld [vmem:[#allocation5 + $0x40] sm:$0xf]
        %v249 = vld [vmem:[#allocation5 + $0x44] sm:$0xf]
        %v250 = vld [vmem:[#allocation5 + $0x48] sm:$0xf]
        %v251 = vld [vmem:[#allocation5 + $0x4c] sm:$0xf]
        %v252 = vld [vmem:[#allocation5 + $0x50] sm:$0xf]
        %v253 = vld [vmem:[#allocation5 + $0x54] sm:$0xf]
        %v254 = vld [vmem:[#allocation5 + $0x58] sm:$0xf]
        %v255 = vld [vmem:[#allocation5 + $0x5c] sm:$0xf]
        %v256 = vld [vmem:[#allocation5 + $0x60] sm:$0xf]
        %v257 = vld [vmem:[#allocation5 + $0x64] sm:$0xf]
        %v258 = vld [vmem:[#allocation5 + $0x68] sm:$0xf]
        %v259 = vld [vmem:[#allocation5 + $0x6c] sm:$0xf]
        %v260 = vld [vmem:[#allocation5 + $0x70] sm:$0xf]
        %v261 = vld [vmem:[#allocation5 + $0x74] sm:$0xf]
        %v262 = vld [vmem:[#allocation5 + $0x78] sm:$0xf]
        %v263 = vld [vmem:[#allocation5 + $0x7c] sm:$0xf]
        %v264 = vld [vmem:[#allocation5 + $0x80] sm:$0xf]
        %v265 = vld [vmem:[#allocation5 + $0x84] sm:$0xf]
        %v266 = vld [vmem:[#allocation5 + $0x88] sm:$0xf]
        %v267 = vld [vmem:[#allocation5 + $0x8c] sm:$0xf]
        %v268 = vld [vmem:[#allocation5 + $0x90] sm:$0xf]
        %v269 = vld [vmem:[#allocation5 + $0x94] sm:$0xf]
        %v270 = vld [vmem:[#allocation5 + $0x98] sm:$0xf]
        %v271 = vld [vmem:[#allocation5 + $0x9c] sm:$0xf]
        %v272 = vld [vmem:[#allocation5 + $0xa0] sm:$0xf]
        %v273 = vld [vmem:[#allocation5 + $0xa4] sm:$0xf]
        %v274 = vld [vmem:[#allocation5 + $0xa8] sm:$0xf]
        %v275 = vld [vmem:[#allocation5 + $0xac] sm:$0xf]
        %v276 = vld [vmem:[#allocation5 + $0xb0] sm:$0xf]
        %v277 = vld [vmem:[#allocation5 + $0xb4] sm:$0xf]
        %v278 = vld [vmem:[#allocation5 + $0xb8] sm:$0xf]
        %v279 = vld [vmem:[#allocation5 + $0xbc] sm:$0xf]
        %v280 = vld [vmem:[#allocation7] sm:$0x1]
        %v281 = vld [vmem:[#allocation7 + $0x1] sm:$0x1]
        %v282 = vld [vmem:[#allocation7 + $0x2] sm:$0x1]
        %v283 = vperm.slane %v280, 0
        %v292 = vunpack.c.l.b16 %v224
        %v293 = vunpack.c.l.b16 %v225
        %v294 = vunpack.c.l.b16 %v226
        %v295 = vunpack.c.l.b16 %v227
        %v296 = vunpack.c.l.b16 %v228
        %v297 = vunpack.c.l.b16 %v229
        %v298 = vunpack.c.l.b16 %v230
        %v299 = vunpack.c.l.b16 %v231
        %v300 = vpack.c.b16 %v293, %v292
        %v301 = vpack.c.b16 %v295, %v294
        %v302 = vpack.c.b16 %v297, %v296
        %v303 = vpack.c.b16 %v299, %v298
        %v324 = vunpack.c.l.b16 %v232
        %v325 = vunpack.c.l.b16 %v233
        %v326 = vunpack.c.l.b16 %v234
        %v327 = vunpack.c.l.b16 %v235
        %v328 = vunpack.c.l.b16 %v236
        %v329 = vunpack.c.l.b16 %v237
        %v330 = vunpack.c.l.b16 %v238
        %v331 = vunpack.c.l.b16 %v239
        %v332 = vunpack.c.l.b16 %v240
        %v333 = vunpack.c.l.b16 %v241
        %v334 = vunpack.c.l.b16 %v242
        %v335 = vunpack.c.l.b16 %v243
        %v336 = vunpack.c.l.b16 %v244
        %v337 = vunpack.c.l.b16 %v245
        %v338 = vunpack.c.l.b16 %v246
        %v339 = vunpack.c.l.b16 %v247
        %v340 = vpack.c.b16 %v325, %v324
        %v341 = vpack.c.b16 %v327, %v326
        %v342 = vpack.c.b16 %v329, %v328
        %v343 = vpack.c.b16 %v331, %v330
        %v344 = vpack.c.b16 %v333, %v332
        %v345 = vpack.c.b16 %v335, %v334
        %v346 = vpack.c.b16 %v337, %v336
        %v347 = vpack.c.b16 %v339, %v338
        %356 = vmatpush.bf16.msra.mxu0 %v347
        %357 = vmatpush.bf16.msra.mxu0 %v346
        %358 = vmatpush.bf16.msra.mxu0 %v345
        %359 = vmatpush.bf16.msra.mxu0 %v344
        %360 = vmatpush.bf16.msra.mxu0 %v343
        %361 = vmatpush.bf16.msra.mxu0 %v342
        %362 = vmatpush.bf16.msra.mxu0 %v341
        %363 = vmatpush.bf16.msra.mxu0 %v340
        %364 = vmatmul.bf16.gmra.mxu0 %v300
        %v365 = vpop.f32.mrf.mxu0
        %v366 = vadd.f32 %v283, %v365
        %v367 = vpop.f32.mrf.mxu0
        %v368 = vadd.f32 %v283, %v367
        %369 = vmatmul.bf16.gmra.mxu0 %v301
        %v370 = vpop.f32.mrf.mxu0
        %v371 = vadd.f32 %v283, %v370
        %v372 = vpop.f32.mrf.mxu0
        %v373 = vadd.f32 %v283, %v372
        %374 = vmatmul.bf16.gmra.mxu0 %v302
        %v375 = vpop.f32.mrf.mxu0
        %v376 = vadd.f32 %v283, %v375
        %v377 = vpop.f32.mrf.mxu0
        %v378 = vadd.f32 %v283, %v377
        %379 = vmatmul.bf16.gmra.mxu0 %v303
        %v380 = vpop.f32.mrf.mxu0
        %v381 = vadd.f32 %v283, %v380
        %v382 = vpop.f32.mrf.mxu0
        %v383 = vadd.f32 %v283, %v382
        %384 = vdwg.mxu0
        %v385 = vmax.f32 %v366, 0.0
        %v386 = vmax.f32 %v368, 0.0
        %v387 = vmax.f32 %v371, 0.0
        %v388 = vmax.f32 %v373, 0.0
        %v389 = vmax.f32 %v376, 0.0
        %v390 = vmax.f32 %v378, 0.0
        %v391 = vmax.f32 %v381, 0.0
        %v392 = vmax.f32 %v383, 0.0
        %v393 = vpack.c.bf16 %v386, %v385
        %v394 = vpack.c.bf16 %v388, %v387
        %v395 = vpack.c.bf16 %v390, %v389
        %v396 = vpack.c.bf16 %v392, %v391
        %v397 = vperm.slane %v281, 0
        %v414 = vunpack.c.l.b16 %v248
        %v415 = vunpack.c.l.b16 %v249
        %v416 = vunpack.c.l.b16 %v250
        %v417 = vunpack.c.l.b16 %v251
        %v418 = vunpack.c.l.b16 %v252
        %v419 = vunpack.c.l.b16 %v253
        %v420 = vunpack.c.l.b16 %v254
        %v421 = vunpack.c.l.b16 %v255
        %v422 = vunpack.c.l.b16 %v256
        %v423 = vunpack.c.l.b16 %v257
        %v424 = vunpack.c.l.b16 %v258
        %v425 = vunpack.c.l.b16 %v259
        %v426 = vunpack.c.l.b16 %v260
        %v427 = vunpack.c.l.b16 %v261
        %v428 = vunpack.c.l.b16 %v262
        %v429 = vunpack.c.l.b16 %v263
        %v430 = vpack.c.b16 %v415, %v414
        %v431 = vpack.c.b16 %v417, %v416
        %v432 = vpack.c.b16 %v419, %v418
        %v433 = vpack.c.b16 %v421, %v420
        %v434 = vpack.c.b16 %v423, %v422
        %v435 = vpack.c.b16 %v425, %v424
        %v436 = vpack.c.b16 %v427, %v426
        %v437 = vpack.c.b16 %v429, %v428
        %446 = vmatpush.bf16.msra.mxu0 %v437
        %447 = vmatpush.bf16.msra.mxu0 %v436
        %448 = vmatpush.bf16.msra.mxu0 %v435
        %449 = vmatpush.bf16.msra.mxu0 %v434
        %450 = vmatpush.bf16.msra.mxu0 %v433
        %451 = vmatpush.bf16.msra.mxu0 %v432
        %452 = vmatpush.bf16.msra.mxu0 %v431
        %453 = vmatpush.bf16.msra.mxu0 %v430
        %454 = vmatmul.bf16.gmra.mxu0 %v393
        %v455 = vpop.f32.mrf.mxu0
        %v456 = vadd.f32 %v397, %v455
        %v457 = vpop.f32.mrf.mxu0
        %v458 = vadd.f32 %v397, %v457
        %459 = vmatmul.bf16.gmra.mxu0 %v394
        %v460 = vpop.f32.mrf.mxu0
        %v461 = vadd.f32 %v397, %v460
        %v462 = vpop.f32.mrf.mxu0
        %v463 = vadd.f32 %v397, %v462
        %464 = vmatmul.bf16.gmra.mxu0 %v395
        %v465 = vpop.f32.mrf.mxu0
        %v466 = vadd.f32 %v397, %v465
        %v467 = vpop.f32.mrf.mxu0
        %v468 = vadd.f32 %v397, %v467
        %469 = vmatmul.bf16.gmra.mxu0 %v396
        %v470 = vpop.f32.mrf.mxu0
        %v471 = vadd.f32 %v397, %v470
        %v472 = vpop.f32.mrf.mxu0
        %v473 = vadd.f32 %v397, %v472
        %474 = vdwg.mxu0
        %v475 = vmax.f32 %v456, 0.0
        %v476 = vmax.f32 %v458, 0.0
        %v477 = vmax.f32 %v461, 0.0
        %v478 = vmax.f32 %v463, 0.0
        %v479 = vmax.f32 %v466, 0.0
        %v480 = vmax.f32 %v468, 0.0
        %v481 = vmax.f32 %v471, 0.0
        %v482 = vmax.f32 %v473, 0.0
        %v483 = vpack.c.bf16 %v476, %v475
        %v484 = vpack.c.bf16 %v478, %v477
        %v485 = vpack.c.bf16 %v480, %v479
        %v486 = vpack.c.bf16 %v482, %v481
        %v487 = vperm.slane %v282, 0
        %v504 = vunpack.c.l.b16 %v264
        %v505 = vunpack.c.l.b16 %v265
        %v506 = vunpack.c.l.b16 %v266
        %v507 = vunpack.c.l.b16 %v267
        %v508 = vunpack.c.l.b16 %v268
        %v509 = vunpack.c.l.b16 %v269
        %v510 = vunpack.c.l.b16 %v270
        %v511 = vunpack.c.l.b16 %v271
        %v512 = vunpack.c.l.b16 %v272
        %v513 = vunpack.c.l.b16 %v273
        %v514 = vunpack.c.l.b16 %v274
        %v515 = vunpack.c.l.b16 %v275
        %v516 = vunpack.c.l.b16 %v276
        %v517 = vunpack.c.l.b16 %v277
        %v518 = vunpack.c.l.b16 %v278
        %v519 = vunpack.c.l.b16 %v279
        %v520 = vpack.c.b16 %v505, %v504
        %v521 = vpack.c.b16 %v507, %v506
        %v522 = vpack.c.b16 %v509, %v508
        %v523 = vpack.c.b16 %v511, %v510
        %v524 = vpack.c.b16 %v513, %v512
        %v525 = vpack.c.b16 %v515, %v514
        %v526 = vpack.c.b16 %v517, %v516
        %v527 = vpack.c.b16 %v519, %v518
        %536 = vmatpush.bf16.msra.mxu0 %v527
        %537 = vmatpush.bf16.msra.mxu0 %v526
        %538 = vmatpush.bf16.msra.mxu0 %v525
        %539 = vmatpush.bf16.msra.mxu0 %v524
        %540 = vmatpush.bf16.msra.mxu0 %v523
        %541 = vmatpush.bf16.msra.mxu0 %v522
        %542 = vmatpush.bf16.msra.mxu0 %v521
        %543 = vmatpush.bf16.msra.mxu0 %v520
        %544 = vmatmul.bf16.gmra.mxu0 %v483
        %v545 = vpop.f32.mrf.mxu0
        %v546 = vadd.f32 %v487, %v545
        %v547 = vpop.f32.mrf.mxu0
        %v548 = vadd.f32 %v487, %v547
        %549 = vmatmul.bf16.gmra.mxu0 %v484
        %v550 = vpop.f32.mrf.mxu0
        %v551 = vadd.f32 %v487, %v550
        %v552 = vpop.f32.mrf.mxu0
        %v553 = vadd.f32 %v487, %v552
        %554 = vmatmul.bf16.gmra.mxu0 %v485
        %v555 = vpop.f32.mrf.mxu0
        %v556 = vadd.f32 %v487, %v555
        %v557 = vpop.f32.mrf.mxu0
        %v558 = vadd.f32 %v487, %v557
        %559 = vmatmul.bf16.gmra.mxu0 %v486
        %v560 = vpop.f32.mrf.mxu0
        %v561 = vadd.f32 %v487, %v560
        %v562 = vpop.f32.mrf.mxu0
        %v563 = vadd.f32 %v487, %v562
        %564 = vdwg.mxu0
        %565 = vst [vmem:[%s221] sm:$0xff] %v546
        %566 = vst [vmem:[%s221 + $0x8] sm:$0xff] %v548
        %567 = vst [vmem:[%s221 + $0x10] sm:$0xff] %v551
        %568 = vst [vmem:[%s221 + $0x18] sm:$0xff] %v553
        %569 = vst [vmem:[%s221 + $0x20] sm:$0xff] %v556
        %570 = vst [vmem:[%s221 + $0x28] sm:$0xff] %v558
        %571 = vst [vmem:[%s221 + $0x30] sm:$0xff] %v561
        %572 = vst [vmem:[%s221 + $0x38] sm:$0xff] %v563
        %s573 = sand.u32 %s97, 1
        %s574 = scalar_lea.sflag [#allocation4], %s573
        %s575 = sand.u32 %s97, 1
        %s576 = smul.addr %s575, 64
        %s577 = scalar_lea.vmem [#allocation8], %s576
        // Predicated region
        $region45: #{tpu_custom_call.1} parent=31 // pred_check
          %p578 = pneg %p107
        $region46: #{tpu_custom_call.1} parent=31 // pred_check_branch
          %580 = sbr.rel (%p578) target = $region48
        $region47: #{tpu_custom_call.1} parent=31 // pred_region
          %s581 = smul.u32 8, %s21
          %583 = vsyncadd %s574, 0
          %s584 = smul.addr %s581, 8
          %s585 = scalar_lea.hbm %s3, %s584
          %s586 = sshll.u32 %s577, 4
          %s587 = int_to_ptr.vmem [resolvable:$true] %s586
          %s588 = sshll.u32 %s585, 4
          %s589 = int_to_ptr.hbm [resolvable:$true] %s588
          %594 = dma.vmem_to_hbm [thread:$0]  %s587, 1024, %s589, %s574, 128, 128, 8
        $region48: #{tpu_custom_call.1} parent=31 // pred_fallthru
          _
      $region32: #{tpu_custom_call.1} parent=5 // pred_fallthru
        _
      %p595 = scmp.le.s32.totalorder 2, %s16
      // Predicated region
      $region49: #{tpu_custom_call.1} parent=5 // pred_check
        %p596 = pneg %p595
      $region50: #{tpu_custom_call.1} parent=5 // pred_check_branch
        %598 = sbr.rel (%p596) target = $region52
      $region51: #{tpu_custom_call.1} parent=5 // pred_region
        %s599 = ssub.s32 %s16, 2
        // Predicated region
        $region53: #{tpu_custom_call.1} parent=51 // pred_check
          %p600 = pneg %p113
        $region54: #{tpu_custom_call.1} parent=51 // pred_check_branch
          %602 = sbr.rel (%p600) target = $region56
        $region55: #{tpu_custom_call.1} parent=51 // pred_region
          %s603 = sand.u32 %s98, 1
          %s604 = scalar_lea.sflag [#allocation4], %s603
          %s605 = sand.u32 %s98, 1
          %s606 = smul.addr %s605, 64
          %s607 = scalar_lea.vmem [#allocation8], %s606
          %609 = dma.done %s604, 1024
        $region56: #{tpu_custom_call.1} parent=51 // pred_fallthru
          _
      $region52: #{tpu_custom_call.1} parent=5 // pred_fallthru
        _
    $region6: #{tpu_custom_call.1} parent=1 // loop_footer
      %s20 = sadd.s32 1, %s16
    $region7: #{tpu_custom_call.1} parent=1 // loop_footer_branch
      %15 = sbr.rel target = $region3
    $region8: #{tpu_custom_call.1} parent=1 // loop_exit
      _
    %610 = vsyncpa [#allocation3], 1
    %s611 = scalar_lea.sflag [#allocation3], 1
    %612 = vsyncpa %s611, 1
    %613 = vsyncpa [#allocation6], 1
    %614 = vsyncpa [#allocation4], 1
    %s615 = scalar_lea.sflag [#allocation4], 1
    %616 = vsyncpa %s615, 1

</llo_original>
